<compile_context>
chip_gen: v6e
topology: v6e:2x2x1
jax: 0.10.0
libtpu: 0.0.40
codegen_flags: <defaults>
</compile_context>

<pallas_src>
import functools
import math

import jax
import jax.numpy as jnp
from jax import lax
from jax.experimental import pallas as pl
from jax.experimental.pallas import tpu as pltpu


def _round_up(a, b):
    return (a + b - 1) // b * b


def _lora_embed_kernel(ids_ref, w_hbm_ref, a_ref, b_ref, o_ref, wbuf, sem, *,
                       tile_t):
    """One grid step handles a tile of `tile_t` tokens.

    ids_ref  : (N_pad,)       int32, SMEM (scalar prefetch) -- token ids
    w_hbm_ref: (V, E)         f32, HBM (pl.ANY)             -- embedding table
    a_ref    : (tile_t, R)    f32, VMEM block               -- lora_A rows of this tile
    b_ref    : (R, E)         f32, VMEM block (resident)    -- lora_B pre-scaled
    o_ref    : (tile_t, E)    f32, VMEM output block
    wbuf     : (2, tile_t, E) f32, VMEM scratch             -- double-buffered gather
    sem      : (2,)           DMA semaphores (one per buffer slot)
    """
    i = pl.program_id(0)
    n = pl.num_programs(0)
    slot = i % 2

    def start_gather(tile_idx, buf_slot):
        base = tile_idx * tile_t

        def body(t, carry):
            row = ids_ref[base + t]
            pltpu.make_async_copy(
                w_hbm_ref.at[row], wbuf.at[buf_slot, t], sem.at[buf_slot]
            ).start()
            return carry

        lax.fori_loop(0, tile_t, body, 0)

    # Prime the pipeline: gather tile 0 into slot 0 on the very first step.
    @pl.when(i == 0)
    def _():
        start_gather(0, 0)

    # Prefetch the next tile's rows into the other slot while computing this one.
    @pl.when(i + 1 < n)
    def _():
        start_gather(i + 1, 1 - slot)

    # Batched LoRA update for the whole tile on the MXU (scaling folded into b).
    lora = jnp.dot(a_ref[...], b_ref[...], preferred_element_type=jnp.float32)

    # Wait for this tile's gathered weight rows. Waits are shape/byte based, so
    # we reconstruct same-shaped descriptors (src row index is irrelevant).
    def wait_body(t, carry):
        pltpu.make_async_copy(
            w_hbm_ref.at[0], wbuf.at[slot, t], sem.at[slot]
        ).wait()
        return carry

    lax.fori_loop(0, tile_t, wait_body, 0)

    o_ref[...] = wbuf[slot] + lora


def lora_embedding_forward(x, weight, lora_A, lora_B, scaling, *, tile_t=128):
    """x: (B, S) int token ids -> (B, S, E) float32."""
    B, S = x.shape
    V, E = weight.shape
    R = lora_A.shape[1]

    # Flatten + clamp ids (avoids OOB HBM DMAs on bad ids), pad to a tile multiple.
    ids = jnp.clip(x.reshape(-1).astype(jnp.int32), 0, V - 1)
    N = ids.shape[0]
    tile_t = min(tile_t, _round_up(N, 8))          # tile_t is a multiple of 8
    n_pad = _round_up(N, tile_t)
    ids_pad = jnp.pad(ids, (0, n_pad - N))         # padded tokens read row 0, dropped later

    # Tiny wrapper-side preprocessing (keeps the kernel a pure streaming gather+GEMM):
    a_rows = jnp.take(lora_A.astype(jnp.float32), ids_pad, axis=0)   # (n_pad, R)
    b_scaled = lora_B.astype(jnp.float32) * jnp.float32(scaling)     # (R, E)

    n_tiles = n_pad // tile_t
    kernel = functools.partial(_lora_embed_kernel, tile_t=tile_t)

    out_flat = pl.pallas_call(
        kernel,
        out_shape=jax.ShapeDtypeStruct((n_pad, E), jnp.float32),
        grid_spec=pltpu.PrefetchScalarGridSpec(
            num_scalar_prefetch=1,
            grid=(n_tiles,),
            in_specs=[
                # dense embedding table stays in HBM; rows gathered by manual DMA
                pl.BlockSpec(memory_space=pl.ANY),
                # lora_A rows for this tile of tokens
                pl.BlockSpec((tile_t, R), lambda i, ids: (i, 0)),
                # scaled lora_B stays resident (same block every step)
                pl.BlockSpec((R, E), lambda i, ids: (0, 0)),
            ],
            out_specs=pl.BlockSpec((tile_t, E), lambda i, ids: (i, 0)),
            scratch_shapes=[
                pltpu.VMEM((2, tile_t, E), jnp.float32),
                pltpu.SemaphoreType.DMA((2,)),
            ],
        ),
        compiler_params=pltpu.CompilerParams(
            # The token-tile axis carries the manual double-buffer state
            # (prime at i==0, prefetch i+1), so it must stay "arbitrary".
            dimension_semantics=("arbitrary",),
        ),
    )(ids_pad, weight.astype(jnp.float32), a_rows, b_scaled)

    return out_flat[:N].reshape(B, S, E)


if __name__ == "__main__":
    # Module hyper-parameters (small, consistent with Embedding.__init__).
    vocab_size = 256
    embed_dim = 128
    rank = 8
    alpha = 16
    scaling = alpha / rank

    # N = 256 tokens -> two 128-token tiles, exercising the double-buffered gather.
    batch, seq = 2, 128

    key = jax.random.PRNGKey(0)
    k_w, k_a, k_b, k_x = jax.random.split(key, 4)

    # Deterministic parameter init following reset_parameters() shapes/stats.
    weight = (jax.random.normal(k_w, (vocab_size, embed_dim), jnp.float32)
              * (1.0 / math.sqrt(vocab_size)))
    lora_A = jax.random.normal(k_a, (vocab_size, rank), jnp.float32) * 0.02
    # reset_parameters() zero-inits lora_B (the LoRA term would vanish); use small
    # random values instead so the low-rank matmul path is actually exercised.
    lora_B = jax.random.normal(k_b, (rank, embed_dim), jnp.float32) * 0.02

    x = jax.random.randint(k_x, (batch, seq), 0, vocab_size, dtype=jnp.int32)

    out = lora_embedding_forward(x, weight, lora_A, lora_B, scaling)
    out = jax.block_until_ready(out)

    # Pure-JAX reference for correctness.
    ref = weight[x] + scaling * (lora_A[x] @ lora_B)
    assert out.shape == (batch, seq, embed_dim)
    assert out.dtype == jnp.float32
    assert jnp.allclose(out, ref, atol=1e-4, rtol=1e-4), "mismatch vs reference"

    print("KERNEL_OK")
</pallas_src>

<mosaic_0001>
module attributes {stable_mosaic.version = 11 : i64} {
  func.func @_lora_embed_kernel(%arg0: i32, %arg1: memref<256xi32, #tpu.memory_space<smem>>, %arg2: memref<256x128xf32, #tpu.memory_space<any>>, %arg3: memref<128x8xf32, #tpu.memory_space<vmem>>, %arg4: memref<8x128xf32, #tpu.memory_space<vmem>>, %arg5: memref<128x128xf32, #tpu.memory_space<vmem>>, %arg6: memref<2x128x128xf32, #tpu.memory_space<vmem>>, %arg7: memref<2x!tpu.dma_semaphore, #tpu.memory_space<semaphore_mem>>) attributes {dimension_semantics = [#tpu.dimension_semantics<arbitrary>], iteration_bounds = array<i64: 2>, scalar_prefetch = 1 : i64, scratch_operands = 2 : i64, tpu.core_type = #tpu.core_type<tc>, window_params = [{}, {transform_indices = @transform_1, window_bounds = array<i64: 128, 8>}, {pipeline_mode = #tpu.pipeline_mode<synchronous>, transform_indices = @transform_2, window_bounds = array<i64: 8, 128>}, {transform_indices = @transform_3, window_bounds = array<i64: 128, 128>}]} {
    %c2_i32 = arith.constant 2 : i32
    %c0_i32 = arith.constant 0 : i32
    %0 = arith.cmpi eq, %c2_i32, %c0_i32 : i32
    %c1_i32 = arith.constant 1 : i32
    %1 = arith.select %0, %c1_i32, %c2_i32 : i32
    %2 = arith.remsi %arg0, %1 : i32
    %c0_i32_0 = arith.constant 0 : i32
    %3 = arith.cmpi ne, %2, %c0_i32_0 : i32
    %c0_i32_1 = arith.constant 0 : i32
    %4 = arith.cmpi slt, %2, %c0_i32_1 : i32
    %c0_i32_2 = arith.constant 0 : i32
    %5 = arith.cmpi slt, %1, %c0_i32_2 : i32
    %6 = arith.xori %4, %5 : i1
    %7 = arith.andi %6, %3 : i1
    %8 = arith.addi %2, %1 : i32
    %9 = arith.select %7, %8, %2 : i32
    %c0_i32_3 = arith.constant 0 : i32
    %10 = arith.cmpi eq, %arg0, %c0_i32_3 : i32
    %11 = arith.extui %10 : i1 to i32
    %c0_i32_4 = arith.constant 0 : i32
    %12 = arith.cmpi ne, %11, %c0_i32_4 : i32
    scf.if %12 {
      %c0_i32_18 = arith.constant 0 : i32
      %c128_i32_19 = arith.constant 128 : i32
      %26 = arith.addi %c0_i32_18, %c128_i32_19 : i32
      %c1_i32_20 = arith.constant 1 : i32
      scf.for %arg8 = %c0_i32_18 to %26 step %c1_i32_20  : i32 {
        %c0_i32_22 = arith.constant 0 : i32
        %27 = arith.addi %c0_i32_22, %arg8 : i32
        %28 = arith.index_cast %27 : i32 to index
        %29 = memref.load %arg1[%28] : memref<256xi32, #tpu.memory_space<smem>>
        %c0_i32_23 = arith.constant 0 : i32
        %c0_i32_24 = arith.constant 0 : i32
        %c0_i32_25 = arith.constant 0 : i32
        %30 = tpu.memref_slice %arg2[%29, %c0_i32_25] : memref<256x128xf32, #tpu.memory_space<any>> -> memref<1x128xf32, #tpu.memory_space<any>>
        %31 = tpu.memref_squeeze %30 : memref<1x128xf32, #tpu.memory_space<any>> -> memref<128xf32, #tpu.memory_space<any>>
        %c0_i32_26 = arith.constant 0 : i32
        %32 = tpu.memref_slice %arg6[%c0_i32_23, %arg8, %c0_i32_26] : memref<2x128x128xf32, #tpu.memory_space<vmem>> -> memref<1x1x128xf32, #tpu.memory_space<vmem>>
        %33 = tpu.memref_squeeze %32 : memref<1x1x128xf32, #tpu.memory_space<vmem>> -> memref<128xf32, #tpu.memory_space<vmem>>
        %34 = tpu.memref_slice %arg7[%c0_i32_24] : memref<2x!tpu.dma_semaphore, #tpu.memory_space<semaphore_mem>> -> memref<1x!tpu.dma_semaphore, #tpu.memory_space<semaphore_mem>>
        %35 = tpu.memref_squeeze %34 : memref<1x!tpu.dma_semaphore, #tpu.memory_space<semaphore_mem>> -> memref<!tpu.dma_semaphore, #tpu.memory_space<semaphore_mem>>
        tpu.enqueue_dma source(%31 : memref<128xf32, #tpu.memory_space<any>>) target(%33 : memref<128xf32, #tpu.memory_space<vmem>>) target_semaphore(%35 : memref<!tpu.dma_semaphore, #tpu.memory_space<semaphore_mem>>)
      }
      %c128_i32_21 = arith.constant 128 : i32
    } else {
    }
    %c1_i32_5 = arith.constant 1 : i32
    %13 = arith.addi %arg0, %c1_i32_5 : i32
    %c2_i32_6 = arith.constant 2 : i32
    %14 = arith.cmpi slt, %13, %c2_i32_6 : i32
    %15 = arith.extui %14 : i1 to i32
    %c0_i32_7 = arith.constant 0 : i32
    %16 = arith.cmpi ne, %15, %c0_i32_7 : i32
    scf.if %16 {
      %c1_i32_18 = arith.constant 1 : i32
      %26 = arith.addi %arg0, %c1_i32_18 : i32
      %c1_i32_19 = arith.constant 1 : i32
      %27 = arith.subi %c1_i32_19, %9 : i32
      %c128_i32_20 = arith.constant 128 : i32
      %28 = arith.muli %26, %c128_i32_20 : i32
      %c0_i32_21 = arith.constant 0 : i32
      %c128_i32_22 = arith.constant 128 : i32
      %29 = arith.addi %c0_i32_21, %c128_i32_22 : i32
      %c1_i32_23 = arith.constant 1 : i32
      scf.for %arg8 = %c0_i32_21 to %29 step %c1_i32_23  : i32 {
        %30 = arith.addi %28, %arg8 : i32
        %31 = arith.index_cast %30 : i32 to index
        %32 = memref.load %arg1[%31] : memref<256xi32, #tpu.memory_space<smem>>
        %c0_i32_25 = arith.constant 0 : i32
        %33 = tpu.memref_slice %arg2[%32, %c0_i32_25] : memref<256x128xf32, #tpu.memory_space<any>> -> memref<1x128xf32, #tpu.memory_space<any>>
        %34 = tpu.memref_squeeze %33 : memref<1x128xf32, #tpu.memory_space<any>> -> memref<128xf32, #tpu.memory_space<any>>
        %c0_i32_26 = arith.constant 0 : i32
        %35 = tpu.memref_slice %arg6[%27, %arg8, %c0_i32_26] : memref<2x128x128xf32, #tpu.memory_space<vmem>> -> memref<1x1x128xf32, #tpu.memory_space<vmem>>
        %36 = tpu.memref_squeeze %35 : memref<1x1x128xf32, #tpu.memory_space<vmem>> -> memref<128xf32, #tpu.memory_space<vmem>>
        %37 = tpu.memref_slice %arg7[%27] : memref<2x!tpu.dma_semaphore, #tpu.memory_space<semaphore_mem>> -> memref<1x!tpu.dma_semaphore, #tpu.memory_space<semaphore_mem>>
        %38 = tpu.memref_squeeze %37 : memref<1x!tpu.dma_semaphore, #tpu.memory_space<semaphore_mem>> -> memref<!tpu.dma_semaphore, #tpu.memory_space<semaphore_mem>>
        tpu.enqueue_dma source(%34 : memref<128xf32, #tpu.memory_space<any>>) target(%36 : memref<128xf32, #tpu.memory_space<vmem>>) target_semaphore(%38 : memref<!tpu.dma_semaphore, #tpu.memory_space<semaphore_mem>>)
      }
      %c128_i32_24 = arith.constant 128 : i32
    } else {
    }
    %c0 = arith.constant 0 : index
    %c0_8 = arith.constant 0 : index
    %17 = vector.load %arg3[%c0, %c0_8] : memref<128x8xf32, #tpu.memory_space<vmem>>, vector<128x8xf32>
    %c0_9 = arith.constant 0 : index
    %c0_10 = arith.constant 0 : index
    %18 = vector.load %arg4[%c0_9, %c0_10] : memref<8x128xf32, #tpu.memory_space<vmem>>, vector<8x128xf32>
    %cst = arith.constant dense<0.000000e+00> : vector<128x128xf32>
    %19 = tpu.matmul %17, %18, %cst {dimension_numbers = #tpu.dot_dimension_numbers<[1], [0], [0], [1], [0, 0, 1, 1], [], []>} : vector<128x8xf32>, vector<8x128xf32>, vector<128x128xf32> -> vector<128x128xf32>
    %c0_i32_11 = arith.constant 0 : i32
    %c128_i32 = arith.constant 128 : i32
    %20 = arith.addi %c0_i32_11, %c128_i32 : i32
    %c1_i32_12 = arith.constant 1 : i32
    scf.for %arg8 = %c0_i32_11 to %20 step %c1_i32_12  : i32 {
      %c0_i32_18 = arith.constant 0 : i32
      %c0_i32_19 = arith.constant 0 : i32
      %26 = tpu.memref_slice %arg2[%c0_i32_18, %c0_i32_19] : memref<256x128xf32, #tpu.memory_space<any>> -> memref<1x128xf32, #tpu.memory_space<any>>
      %27 = tpu.memref_squeeze %26 : memref<1x128xf32, #tpu.memory_space<any>> -> memref<128xf32, #tpu.memory_space<any>>
      %c0_i32_20 = arith.constant 0 : i32
      %28 = tpu.memref_slice %arg6[%9, %arg8, %c0_i32_20] : memref<2x128x128xf32, #tpu.memory_space<vmem>> -> memref<1x1x128xf32, #tpu.memory_space<vmem>>
      %29 = tpu.memref_squeeze %28 : memref<1x1x128xf32, #tpu.memory_space<vmem>> -> memref<128xf32, #tpu.memory_space<vmem>>
      %30 = tpu.memref_slice %arg7[%9] : memref<2x!tpu.dma_semaphore, #tpu.memory_space<semaphore_mem>> -> memref<1x!tpu.dma_semaphore, #tpu.memory_space<semaphore_mem>>
      %31 = tpu.memref_squeeze %30 : memref<1x!tpu.dma_semaphore, #tpu.memory_space<semaphore_mem>> -> memref<!tpu.dma_semaphore, #tpu.memory_space<semaphore_mem>>
      tpu.wait_dma2 semaphore(%31 : memref<!tpu.dma_semaphore, #tpu.memory_space<semaphore_mem>>) src(%27 : memref<128xf32, #tpu.memory_space<any>>) dst(%29 : memref<128xf32, #tpu.memory_space<vmem>>)
    }
    %c128_i32_13 = arith.constant 128 : i32
    %21 = arith.index_cast %9 : i32 to index
    %c0_14 = arith.constant 0 : index
    %c0_15 = arith.constant 0 : index
    %22 = vector.load %arg6[%21, %c0_14, %c0_15] : memref<2x128x128xf32, #tpu.memory_space<vmem>>, vector<1x128x128xf32>
    %23 = vector.shape_cast %22 : vector<1x128x128xf32> to vector<128x128xf32>
    %24 = arith.addf %23, %19 : vector<128x128xf32>
    %c0_16 = arith.constant 0 : index
    %c0_17 = arith.constant 0 : index
    %25 = vector.load %arg5[%c0_16, %c0_17] : memref<128x128xf32, #tpu.memory_space<vmem>>, vector<128x128xf32>
    tpu.vector_store %arg5[%c0_16, %c0_17], %24 {strides = array<i32>} : memref<128x128xf32, #tpu.memory_space<vmem>>, vector<128x128xf32>,
    return
  }
  func.func @transform_1(%arg0: i32, %arg1: memref<256xi32, #tpu.memory_space<smem>>) -> (i32, i32) {
    %c0_i32 = arith.constant 0 : i32
    %c0_i32_0 = arith.constant 0 : i32
    return %arg0, %c0_i32 : i32, i32
  }
  func.func @transform_2(%arg0: i32, %arg1: memref<256xi32, #tpu.memory_space<smem>>) -> (i32, i32) {
    %c0_i32 = arith.constant 0 : i32
    %c0_i32_0 = arith.constant 0 : i32
    %c0_i32_1 = arith.constant 0 : i32
    return %c0_i32, %c0_i32_0 : i32, i32
  }
  func.func @transform_3(%arg0: i32, %arg1: memref<256xi32, #tpu.memory_space<smem>>) -> (i32, i32) {
    %c0_i32 = arith.constant 0 : i32
    %c0_i32_0 = arith.constant 0 : i32
    return %arg0, %c0_i32 : i32, i32
  }
}

</mosaic_0001>

<llo_original>
// kernel: tpu_custom_call.1
$region0: #{tpu_custom_call.1}
  #allocation0 [shape = 'u32[]', space=smem, size = 0x4, offset = 0x4, fixed_abs, tag = 'smem constant byte address 0x4 - core index']
  #allocation1 [shape = 'u32[144,128]{1,0:T(1,128)}', space=vmem, size = 0x12000, scoped, tag = 'internal scratch']
  #allocation2 [shape = 'f32[2,128,128]{2,1,0:T(8,128)}', space=vmem, size = 0x20000, scoped, tag = 'scratch operand']
  #allocation3 [shape = 's32[2]{0}', space=sflag, size = 0x8, scoped, tag = 'scratch operand']
  #allocation4 [shape = 's32[1]{0}', space=sflag, size = 0x4, scoped, tag = 'scoped memory for tpu_custom_call.1']
  #allocation5 [shape = 'u8[1024]{0}', space=smem, size = 0x400, scoped, tag = 'prefetched SMEM operand 0']
  #allocation8 [shape = 's32[]', space=sflag, size = 0x4, offset = 0, fixed_abs, tag = 'sflag constant byte address 0x0 - dummy sync flag']
  #allocation9 [shape = 's32[]', space=sflag, size = 0x4, offset = 0, fixed_abs, tag = 'sflag constant byte address 0x0 - dummy sync flag']
  %s0 = inlined_call_operand.vmem [shape: s32[256], index: 0, kind: input, shape index: {}]
  %s1 = inlined_call_operand.vmem [shape: f32[256,128], index: 1, kind: input, shape index: {}]
  %s2 = inlined_call_operand.vmem [shape: f32[256,8], index: 2, kind: input, shape index: {}]
  %s3 = inlined_call_operand.vmem [shape: f32[8,128], index: 3, kind: input, shape index: {}]
  %s4 = inlined_call_operand.hbm [shape: f32[256,128], index: 4, kind: output, shape index: {}]
  %s5 = sld [smem:[#allocation0]]
  $region130: #{tpu_custom_call.1} parent=0
    _
  %s7 = ssub.s32 1, %s5
  %s8 = scalar_select 0, %s7, %s5
  %s9 = sshll.u32 %s0, 4
  %s10 = int_to_ptr.vmem [resolvable:$true] %s9
  %12 = dma.vmem_to_smem %s10, 32, [#allocation5], [#allocation4]
  %13 = dma.done [#allocation4], 32
  %14 = sfence
  $region1: #{tpu_custom_call.1} parent=0
    #allocation6 [shape = 'u8[131072]{0}', space=vmem, size = 0x20000, scoped, tag = 'output window, operand 0']
    #allocation7 [shape = 's32[2]{0}', space=sflag, size = 0x8, scoped, tag = 'scoped memory for tpu_custom_call.1']
    %15 = vsyncpa [#allocation7], 0
    %s16 = scalar_lea.sflag [#allocation7], 1
    %17 = vsyncpa %s16, 0
    loop: start=0, step=1, limit=4
    $region2: #{tpu_custom_call.1} parent=1 // loop_pre_header
      _
    $region3: #{tpu_custom_call.1} parent=1 // loop_header
      %s19 = sphi 0, %s23
      %p20 = scmp.ge.s32.totalorder %s19, 4
      %s29 = sphi 0, %s31
      %s32 = sphi 0, %s29
      %s33 = sphi 0, %s32
      %s49 = sphi 0, %s33
      %s53 = sphi 0, %s53
      %s55 = sphi 0, %s53
      %s56 = sphi 0, %s55
      %s70 = sphi 0, %s56
      %s76 = sphi 0, %s78
      %s79 = sphi 0, %s76
      %s80 = sphi 0, %s79
      %s96 = sphi 0, %s80
    $region4: #{tpu_custom_call.1} parent=1 // loop_header_branch
      %22 = sbr.rel (%p20) target = $region8
    $region5: #{tpu_custom_call.1} parent=1 // loop_body
      %s24 = ssub.s32 %s19, 1
      %s25 = ssub.s32 %s19, 2
      %s26 = sadd.s32 %s19, 1
      %s27 = ssub.s32 %s19, %s26
      %p28 = scmp.eq.s32.totalorder %s27, 0
      %s30 = sadd.s32 %s29, 1
      %s31 = scalar_select %p28, %s29, %s30
      %p34 = pneg %p28
      %p35 = scmp.eq.s32.totalorder %s19, 1
      %p36 = por %p34, %p35
      %p37 = scmp.ne.s32.totalorder %s29, %s32
      %p38 = scmp.eq.s32.totalorder %s19, 0
      %p39 = por %p37, %p38
      %p40 = scmp.ne.s32.totalorder %s29, %s32
      %p41 = scmp.eq.s32.totalorder %s24, 1
      %p42 = por %p40, %p41
      %p43 = scmp.ne.s32.totalorder %s32, %s33
      %p44 = scmp.eq.s32.totalorder %s24, 0
      %p45 = por %p43, %p44
      %p46 = scmp.ne.s32.totalorder %s32, %s33
      %p47 = scmp.eq.s32.totalorder %s25, 1
      %p48 = por %p46, %p47
      %p50 = scmp.ne.s32.totalorder %s33, %s49
      %p51 = scmp.eq.s32.totalorder %s25, 0
      %p52 = por %p50, %p51
      %s54 = sadd.s32 %s53, 1
      %p57 = scmp.eq.s32.totalorder %s19, 1
      %p58 = scmp.ne.s32.totalorder %s53, %s55
      %p59 = scmp.eq.s32.totalorder %s19, 0
      %p60 = por %p58, %p59
      %p61 = scmp.ne.s32.totalorder %s53, %s55
      %p62 = scmp.eq.s32.totalorder %s24, 1
      %p63 = por %p61, %p62
      %p64 = scmp.ne.s32.totalorder %s55, %s56
      %p65 = scmp.eq.s32.totalorder %s24, 0
      %p66 = por %p64, %p65
      %p67 = scmp.ne.s32.totalorder %s55, %s56
      %p68 = scmp.eq.s32.totalorder %s25, 1
      %p69 = por %p67, %p68
      %p71 = scmp.ne.s32.totalorder %s56, %s70
      %p72 = scmp.eq.s32.totalorder %s25, 0
      %p73 = por %p71, %p72
      %s74 = ssub.s32 %s19, %s26
      %p75 = scmp.eq.s32.totalorder %s74, 0
      %s77 = sadd.s32 %s76, 1
      %s78 = scalar_select %p75, %s76, %s77
      %p81 = pneg %p75
      %p82 = scmp.eq.s32.totalorder %s19, 1
      %p83 = por %p81, %p82
      %p84 = scmp.ne.s32.totalorder %s76, %s79
      %p85 = scmp.eq.s32.totalorder %s19, 0
      %p86 = por %p84, %p85
      %p87 = scmp.ne.s32.totalorder %s76, %s79
      %p88 = scmp.eq.s32.totalorder %s24, 1
      %p89 = por %p87, %p88
      %p90 = scmp.ne.s32.totalorder %s79, %s80
      %p91 = scmp.eq.s32.totalorder %s24, 0
      %p92 = por %p90, %p91
      %p93 = scmp.ne.s32.totalorder %s79, %s80
      %p94 = scmp.eq.s32.totalorder %s25, 1
      %p95 = por %p93, %p94
      %p97 = scmp.ne.s32.totalorder %s80, %s96
      %p98 = scmp.eq.s32.totalorder %s25, 0
      %p99 = por %p97, %p98
      %p100 = scmp.le.s32.totalorder 1, %s19
      %p101 = scmp.lt.s32.totalorder %s19, 3
      %p102 = pnand %p100, %p101
      %p103 = pneg %p102
      // Predicated region
      $region9: #{tpu_custom_call.1} parent=5 // pred_check
        _
      $region10: #{tpu_custom_call.1} parent=5 // pred_check_branch
        %105 = sbr.rel (%p102) target = $region12
      $region11: #{tpu_custom_call.1} parent=5 // pred_region
        %s106 = ssub.s32 %s19, 1
        // Predicated region
        $region13: #{tpu_custom_call.1} parent=11 // pred_check
          %p107 = pneg %p66
        $region14: #{tpu_custom_call.1} parent=11 // pred_check_branch
          %109 = sbr.rel (%p107) target = $region16
        $region15: #{tpu_custom_call.1} parent=11 // pred_region
          _
        $region16: #{tpu_custom_call.1} parent=11 // pred_fallthru
          _
      $region12: #{tpu_custom_call.1} parent=5 // pred_fallthru
        _
      %p110 = scmp.lt.s32.totalorder %s19, 2
      // Predicated region
      $region17: #{tpu_custom_call.1} parent=5 // pred_check
        %p111 = pneg %p110
      $region18: #{tpu_custom_call.1} parent=5 // pred_check_branch
        %113 = sbr.rel (%p111) target = $region20
      $region19: #{tpu_custom_call.1} parent=5 // pred_region
        // Predicated region
        $region21: #{tpu_custom_call.1} parent=19 // pred_check
          %p114 = pneg %p39
        $region22: #{tpu_custom_call.1} parent=19 // pred_check_branch
          %116 = sbr.rel (%p114) target = $region24
        $region23: #{tpu_custom_call.1} parent=19 // pred_region
          %s117 = smul.u32 16, %s19
          %p118 = scmp.lt.s32.totalorder %s117, 31
          %s119 = scalar_select %p118, %s117, 31
          %s120 = smul.addr %s119, 8
          %s121 = scalar_lea.vmem %s2, %s120
          %s122 = smul.u32 16, %s19
        $region24: #{tpu_custom_call.1} parent=19 // pred_fallthru
          _
      $region20: #{tpu_custom_call.1} parent=5 // pred_fallthru
        _
      %p123 = scmp.le.s32.totalorder 1, %s19
      %p124 = scmp.lt.s32.totalorder %s19, 3
      %p125 = pnand %p123, %p124
      %p126 = pneg %p125
      // Predicated region
      $region25: #{tpu_custom_call.1} parent=5 // pred_check
        _
      $region26: #{tpu_custom_call.1} parent=5 // pred_check_branch
        %128 = sbr.rel (%p125) target = $region28
      $region27: #{tpu_custom_call.1} parent=5 // pred_region
        %s129 = ssub.s32 %s19, 1
        %s130 = smul.u32 16, %s24
        %p131 = scmp.lt.s32.totalorder %s130, 31
        %s132 = scalar_select %p131, %s130, 31
        %s133 = smul.addr %s132, 8
        %s134 = scalar_lea.vmem %s2, %s133
        %p135 = pneg %p45
        %p136 = pneg %p42
        %p137 = pneg %p66
        %p138 = pneg %p63
        %p139 = pneg %p92
        %p140 = pneg %p89
        %s141 = sand.u32 %s79, 1
        %s142 = scalar_lea.sflag [#allocation7], %s141
        %s143 = sand.u32 %s79, 1
        %s144 = smul.addr %s143, 128
        %s145 = scalar_lea.vmem [#allocation6], %s144
        %s146 = smul.u32 16, %s24
        %p147 = scmp.lt.s32.totalorder %s146, 31
        %s148 = scalar_select %p147, %s146, 31
        %s149 = smul.addr %s148, 8
        %s150 = scalar_lea.vmem %s2, %s149
        %s151 = smul.u32 16, %s24
        %s152 = smul.u32 16, %s24
        %p153 = scmp.lt.s32.totalorder %s24, 0
        %s154 = ssub.s32 0, %s24
        %s155 = scalar_select %p153, %s154, %s24
        %s156 = sand.u32 %s155, 1
        %s157 = ssub.s32 0, %s156
        %s158 = scalar_select %p153, %s157, %s156
        %p159 = scmp.ne.s32.totalorder %s158, 0
        %p160 = scmp.lt.s32.totalorder %s158, 0
        %p161 = pnand %p160, %p159
        %p162 = pneg %p161
        %s163 = sadd.s32 %s158, 2
        %s164 = scalar_select %p162, %s163, %s158
        %p165 = scmp.eq.s32.totalorder %s24, 0
        // Predicated region
        $region29: #{tpu_custom_call.1} parent=27 // pred_check
          %p166 = pneg %p165
        $region30: #{tpu_custom_call.1} parent=27 // pred_check_branch
          %168 = sbr.rel (%p166) target = $region32
        $region31: #{tpu_custom_call.1} parent=27 // pred_region
          loop: start=0, step=1, limit=128
          $region33: #{tpu_custom_call.1} parent=31 // loop_pre_header
            _
          $region34: #{tpu_custom_call.1} parent=31 // loop_header
            %s170 = sphi 0, %s174
            %p171 = scmp.ge.s32.totalorder %s170, 128
          $region35: #{tpu_custom_call.1} parent=31 // loop_header_branch
            %173 = sbr.rel (%p171) target = $region39
          $region36: #{tpu_custom_call.1} parent=31 // loop_body
            %s175 = sld [smem:[#allocation5 + %s170]]
            %s176 = scalar_lea.vmem %s1, %s175
            %s177 = scalar_lea.vmem [#allocation2], %s170
            %p179 = scmp.lt.u32.totalorder 1, 8
            %p180 = pneg %p179
            // Predicated region
            $region40: #{tpu_custom_call.1} parent=36 // pred_check
              _
            $region41: #{tpu_custom_call.1} parent=36 // pred_check_branch
              %182 = sbr.rel (%p179) target = $region43
            $region42: #{tpu_custom_call.1} parent=36 // pred_region
              %s198 = sand.u32 1, 7
              %p199 = scmp.eq.s32.totalorder %s198, 0
              %p200 = pneg %p199
              // Predicated region
              $region55: #{tpu_custom_call.1} parent=42 // pred_check
                _
              $region56: #{tpu_custom_call.1} parent=42 // pred_check_branch
                %202 = sbr.rel (%p199) target = $region58
              $region57: #{tpu_custom_call.1} parent=42 // pred_region
                %s203 = sand.u32 1, 7
                %s204 = ssub.s32 1, %s203
                %s205 = scalar_lea.vmem %s176, %s204
                %s206 = ssub.s32 1, %s203
                %s207 = scalar_lea.vmem %s177, %s206 [#allocation2]
                %s208 = sshll.u32 1, %s203
                %s209 = ssub.s32 %s208, 1
                loop: start=0, step=1, limit=1
                $region59: #{tpu_custom_call.1} parent=57 // loop_pre_header
                  _
                $region60: #{tpu_custom_call.1} parent=57 // loop_header
                  %s211 = sphi 0, %s215
                  %p212 = scmp.ge.s32.totalorder %s211, 1
                  %s216 = sphi %s205, %s205
                  %s217 = sphi %s207, %s207
                $region61: #{tpu_custom_call.1} parent=57 // loop_header_branch
                  %214 = sbr.rel (%p212) target = $region65
                $region62: #{tpu_custom_call.1} parent=57 // loop_body
                  %v218 = vld [vmem:[%s216] sm:%s209]
                  %219 = vst [vmem:[%s217] sm:%s209] %v218
                $region63: #{tpu_custom_call.1} parent=57 // loop_footer
                  %s215 = sadd.s32 1, %s211
                $region64: #{tpu_custom_call.1} parent=57 // loop_footer_branch
                  %210 = sbr.rel target = $region60
                $region65: #{tpu_custom_call.1} parent=57 // loop_exit
                  _
              $region58: #{tpu_custom_call.1} parent=42 // pred_fallthru
                _
            $region43: #{tpu_custom_call.1} parent=36 // pred_fallthru
              _
            // Predicated region
            $region44: #{tpu_custom_call.1} parent=36 // pred_check
              %p183 = pneg %p179
            $region45: #{tpu_custom_call.1} parent=36 // pred_check_branch
              %185 = sbr.rel (%p183) target = $region47
            $region46: #{tpu_custom_call.1} parent=36 // pred_region
              %s186 = sshll.u32 1, 1
              %s187 = ssub.s32 %s186, 1
              loop: start=0, step=1, limit=1
              $region48: #{tpu_custom_call.1} parent=46 // loop_pre_header
                _
              $region49: #{tpu_custom_call.1} parent=46 // loop_header
                %s189 = sphi 0, %s193
                %p190 = scmp.ge.s32.totalorder %s189, 1
                %s194 = sphi %s176, %s176
                %s195 = sphi %s177, %s177
              $region50: #{tpu_custom_call.1} parent=46 // loop_header_branch
                %192 = sbr.rel (%p190) target = $region54
              $region51: #{tpu_custom_call.1} parent=46 // loop_body
                %v196 = vld [vmem:[%s194] sm:%s187]
                %197 = vst [vmem:[%s195] sm:%s187] %v196
              $region52: #{tpu_custom_call.1} parent=46 // loop_footer
                %s193 = sadd.s32 1, %s189
              $region53: #{tpu_custom_call.1} parent=46 // loop_footer_branch
                %188 = sbr.rel target = $region49
              $region54: #{tpu_custom_call.1} parent=46 // loop_exit
                _
            $region47: #{tpu_custom_call.1} parent=36 // pred_fallthru
              _
            // Predicated region
            $region66: #{tpu_custom_call.1} parent=36 // pred_check
              _
            $region67: #{tpu_custom_call.1} parent=36 // pred_check_branch
              %222 = sbr.rel (0) target = $region69
            $region68: #{tpu_custom_call.1} parent=36 // pred_region
              %223 = vsyncadd [#allocation3], 16
            $region69: #{tpu_custom_call.1} parent=36 // pred_fallthru
              _
          $region37: #{tpu_custom_call.1} parent=31 // loop_footer
            %s174 = sadd.s32 1, %s170
          $region38: #{tpu_custom_call.1} parent=31 // loop_footer_branch
            %169 = sbr.rel target = $region34
          $region39: #{tpu_custom_call.1} parent=31 // loop_exit
            _
        $region32: #{tpu_custom_call.1} parent=27 // pred_fallthru
          _
        %s224 = sadd.s32 %s24, 1
        %p225 = scmp.lt.s32.totalorder %s224, 2
        // Predicated region
        $region70: #{tpu_custom_call.1} parent=27 // pred_check
          %p226 = pneg %p225
        $region71: #{tpu_custom_call.1} parent=27 // pred_check_branch
          %228 = sbr.rel (%p226) target = $region73
        $region72: #{tpu_custom_call.1} parent=27 // pred_region
          %s229 = ssub.s32 1, %s164
          %s230 = smul.u32 %s224, 128
          loop: start=0, step=1, limit=128
          $region74: #{tpu_custom_call.1} parent=72 // loop_pre_header
            _
          $region75: #{tpu_custom_call.1} parent=72 // loop_header
            %s232 = sphi 0, %s236
            %p233 = scmp.ge.s32.totalorder %s232, 128
          $region76: #{tpu_custom_call.1} parent=72 // loop_header_branch
            %235 = sbr.rel (%p233) target = $region80
          $region77: #{tpu_custom_call.1} parent=72 // loop_body
            %s237 = sadd.s32 %s230, %s232
            %s238 = sld [smem:[#allocation5 + %s237]]
            %s239 = scalar_lea.vmem %s1, %s238
            %s240 = smul.u32 %s229, 128
            %s241 = sadd.s32 %s232, %s240
            %s242 = scalar_lea.vmem [#allocation2], %s241
            %s243 = scalar_lea.sflag [#allocation3], %s229
            %p245 = scmp.lt.u32.totalorder 1, 8
            %p246 = pneg %p245
            // Predicated region
            $region81: #{tpu_custom_call.1} parent=77 // pred_check
              _
            $region82: #{tpu_custom_call.1} parent=77 // pred_check_branch
              %248 = sbr.rel (%p245) target = $region84
            $region83: #{tpu_custom_call.1} parent=77 // pred_region
              %s264 = sand.u32 1, 7
              %p265 = scmp.eq.s32.totalorder %s264, 0
              %p266 = pneg %p265
              // Predicated region
              $region96: #{tpu_custom_call.1} parent=83 // pred_check
                _
              $region97: #{tpu_custom_call.1} parent=83 // pred_check_branch
                %268 = sbr.rel (%p265) target = $region99
              $region98: #{tpu_custom_call.1} parent=83 // pred_region
                %s269 = sand.u32 1, 7
                %s270 = ssub.s32 1, %s269
                %s271 = scalar_lea.vmem %s239, %s270
                %s272 = ssub.s32 1, %s269
                %s273 = scalar_lea.vmem %s242, %s272 [#allocation2]
                %s274 = sshll.u32 1, %s269
                %s275 = ssub.s32 %s274, 1
                loop: start=0, step=1, limit=1
                $region100: #{tpu_custom_call.1} parent=98 // loop_pre_header
                  _
                $region101: #{tpu_custom_call.1} parent=98 // loop_header
                  %s277 = sphi 0, %s281
                  %p278 = scmp.ge.s32.totalorder %s277, 1
                  %s282 = sphi %s271, %s271
                  %s283 = sphi %s273, %s273
                $region102: #{tpu_custom_call.1} parent=98 // loop_header_branch
                  %280 = sbr.rel (%p278) target = $region106
                $region103: #{tpu_custom_call.1} parent=98 // loop_body
                  %v284 = vld [vmem:[%s282] sm:%s275]
                  %285 = vst [vmem:[%s283] sm:%s275] %v284
                $region104: #{tpu_custom_call.1} parent=98 // loop_footer
                  %s281 = sadd.s32 1, %s277
                $region105: #{tpu_custom_call.1} parent=98 // loop_footer_branch
                  %276 = sbr.rel target = $region101
                $region106: #{tpu_custom_call.1} parent=98 // loop_exit
                  _
              $region99: #{tpu_custom_call.1} parent=83 // pred_fallthru
                _
            $region84: #{tpu_custom_call.1} parent=77 // pred_fallthru
              _
            // Predicated region
            $region85: #{tpu_custom_call.1} parent=77 // pred_check
              %p249 = pneg %p245
            $region86: #{tpu_custom_call.1} parent=77 // pred_check_branch
              %251 = sbr.rel (%p249) target = $region88
            $region87: #{tpu_custom_call.1} parent=77 // pred_region
              %s252 = sshll.u32 1, 1
              %s253 = ssub.s32 %s252, 1
              loop: start=0, step=1, limit=1
              $region89: #{tpu_custom_call.1} parent=87 // loop_pre_header
                _
              $region90: #{tpu_custom_call.1} parent=87 // loop_header
                %s255 = sphi 0, %s259
                %p256 = scmp.ge.s32.totalorder %s255, 1
                %s260 = sphi %s239, %s239
                %s261 = sphi %s242, %s242
              $region91: #{tpu_custom_call.1} parent=87 // loop_header_branch
                %258 = sbr.rel (%p256) target = $region95
              $region92: #{tpu_custom_call.1} parent=87 // loop_body
                %v262 = vld [vmem:[%s260] sm:%s253]
                %263 = vst [vmem:[%s261] sm:%s253] %v262
              $region93: #{tpu_custom_call.1} parent=87 // loop_footer
                %s259 = sadd.s32 1, %s255
              $region94: #{tpu_custom_call.1} parent=87 // loop_footer_branch
                %254 = sbr.rel target = $region90
              $region95: #{tpu_custom_call.1} parent=87 // loop_exit
                _
            $region88: #{tpu_custom_call.1} parent=77 // pred_fallthru
              _
            // Predicated region
            $region107: #{tpu_custom_call.1} parent=77 // pred_check
              _
            $region108: #{tpu_custom_call.1} parent=77 // pred_check_branch
              %288 = sbr.rel (0) target = $region110
            $region109: #{tpu_custom_call.1} parent=77 // pred_region
              %289 = vsyncadd %s243, 16
            $region110: #{tpu_custom_call.1} parent=77 // pred_fallthru
              _
          $region78: #{tpu_custom_call.1} parent=72 // loop_footer
            %s236 = sadd.s32 1, %s232
          $region79: #{tpu_custom_call.1} parent=72 // loop_footer_branch
            %231 = sbr.rel target = $region75
          $region80: #{tpu_custom_call.1} parent=72 // loop_exit
            _
        $region73: #{tpu_custom_call.1} parent=27 // pred_fallthru
          _
        %v290 = vld [vmem:[%s150] sm:$0xff]
        %v291 = vld [vmem:[%s150 + $0x8] sm:$0xff]
        %v292 = vld [vmem:[%s150 + $0x10] sm:$0xff]
        %v293 = vld [vmem:[%s150 + $0x18] sm:$0xff]
        %v294 = vld [vmem:[%s150 + $0x20] sm:$0xff]
        %v295 = vld [vmem:[%s150 + $0x28] sm:$0xff]
        %v296 = vld [vmem:[%s150 + $0x30] sm:$0xff]
        %v297 = vld [vmem:[%s150 + $0x38] sm:$0xff]
        %v298 = vld [vmem:[%s150 + $0x40] sm:$0xff]
        %v299 = vld [vmem:[%s150 + $0x48] sm:$0xff]
        %v300 = vld [vmem:[%s150 + $0x50] sm:$0xff]
        %v301 = vld [vmem:[%s150 + $0x58] sm:$0xff]
        %v302 = vld [vmem:[%s150 + $0x60] sm:$0xff]
        %v303 = vld [vmem:[%s150 + $0x68] sm:$0xff]
        %v304 = vld [vmem:[%s150 + $0x70] sm:$0xff]
        %v305 = vld [vmem:[%s150 + $0x78] sm:$0xff]
        %v306 = vld [vmem:[%s3] sm:$0xff]
        %vm307 = vcmask 64512
        %v309 = vsel %vm307, %v290, 0
        %v312 = vsel %vm307, %v291, 0
        %v315 = vsel %vm307, %v292, 0
        %v318 = vsel %vm307, %v293, 0
        %v321 = vsel %vm307, %v294, 0
        %v324 = vsel %vm307, %v295, 0
        %v327 = vsel %vm307, %v296, 0
        %v330 = vsel %vm307, %v297, 0
        %v333 = vsel %vm307, %v298, 0
        %v336 = vsel %vm307, %v299, 0
        %v339 = vsel %vm307, %v300, 0
        %v342 = vsel %vm307, %v301, 0
        %v345 = vsel %vm307, %v302, 0
        %v348 = vsel %vm307, %v303, 0
        %v351 = vsel %vm307, %v304, 0
        %v354 = vsel %vm307, %v305, 0
        %356 = vmatprep.subr.mxu0 0.0
        %357 = vmatpush1.msra.mxu0 0.0
        %358 = vmatprep.subr.mxu0 0.0
        %359 = vmatpush1.msra.mxu0 0.0
        %360 = vmatprep.subr.mxu0 0.0
        %361 = vmatpush1.msra.mxu0 0.0
        %362 = vmatprep.subr.mxu0 0.0
        %363 = vmatpush1.msra.mxu0 0.0
        %364 = vmatprep.subr.mxu0 0.0
        %365 = vmatpush1.msra.mxu0 0.0
        %366 = vmatprep.subr.mxu0 0.0
        %367 = vmatpush1.msra.mxu0 0.0
        %368 = vmatprep.subr.mxu0 0.0
        %369 = vmatpush1.msra.mxu0 0.0
        %370 = vmatprep.subr.mxu0 0.0
        %371 = vmatpush1.msra.mxu0 0.0
        %372 = vmatprep.subr.mxu0 0.0
        %373 = vmatpush1.msra.mxu0 0.0
        %374 = vmatprep.subr.mxu0 0.0
        %375 = vmatpush1.msra.mxu0 0.0
        %376 = vmatprep.subr.mxu0 0.0
        %377 = vmatpush1.msra.mxu0 0.0
        %378 = vmatprep.subr.mxu0 0.0
        %379 = vmatpush1.msra.mxu0 0.0
        %380 = vmatprep.subr.mxu0 0.0
        %381 = vmatpush1.msra.mxu0 0.0
        %382 = vmatprep.subr.mxu0 0.0
        %383 = vmatpush1.msra.mxu0 0.0
        %384 = vmatprep.subr.mxu0 0.0
        %385 = vmatpush1.msra.mxu0 0.0
        %386 = vmatprep.subr.mxu0 0.0
        %387 = vmatpush1.msra.mxu0 %v306
        %388 = vmatprep.subr.mxu0 0.0
        %389 = vmatpush2.msra.mxu0 0.0
        %390 = vmatprep.subr.mxu0 0.0
        %391 = vmatpush2.msra.mxu0 0.0
        %392 = vmatprep.subr.mxu0 0.0
        %393 = vmatpush2.msra.mxu0 0.0
        %394 = vmatprep.subr.mxu0 0.0
        %395 = vmatpush2.msra.mxu0 0.0
        %396 = vmatprep.subr.mxu0 0.0
        %397 = vmatpush2.msra.mxu0 0.0
        %398 = vmatprep.subr.mxu0 0.0
        %399 = vmatpush2.msra.mxu0 0.0
        %400 = vmatprep.subr.mxu0 0.0
        %401 = vmatpush2.msra.mxu0 0.0
        %402 = vmatprep.subr.mxu0 0.0
        %403 = vmatpush2.msra.mxu0 0.0
        %404 = vmatprep.subr.mxu0 0.0
        %405 = vmatpush2.msra.mxu0 0.0
        %406 = vmatprep.subr.mxu0 0.0
        %407 = vmatpush2.msra.mxu0 0.0
        %408 = vmatprep.subr.mxu0 0.0
        %409 = vmatpush2.msra.mxu0 0.0
        %410 = vmatprep.subr.mxu0 0.0
        %411 = vmatpush2.msra.mxu0 0.0
        %412 = vmatprep.subr.mxu0 0.0
        %413 = vmatpush2.msra.mxu0 0.0
        %414 = vmatprep.subr.mxu0 0.0
        %415 = vmatpush2.msra.mxu0 0.0
        %416 = vmatprep.subr.mxu0 0.0
        %417 = vmatpush2.msra.mxu0 0.0
        %418 = vmatprep.subr.mxu0 0.0
        %419 = vmatpush2.msra.mxu0 0.0
        %420 = vmatprep.mubr.f32.mxu0 0.0
        %421 = vmatmul.mubr.f32.gmra.mxu0 %v309
        %v422 = vpop.f32.mrf.mxu0
        %v423 = vadd.f32 0.0, %v422
        %v424 = vpop.f32.mrf.mxu0
        %425 = vmatprep.mubr.f32.mxu0 0.0
        %426 = vmatmul.mubr.f32.gmra.mxu0 %v312
        %v427 = vpop.f32.mrf.mxu0
        %v428 = vadd.f32 0.0, %v427
        %v429 = vpop.f32.mrf.mxu0
        %430 = vmatprep.mubr.f32.mxu0 0.0
        %431 = vmatmul.mubr.f32.gmra.mxu0 %v315
        %v432 = vpop.f32.mrf.mxu0
        %v433 = vadd.f32 0.0, %v432
        %v434 = vpop.f32.mrf.mxu0
        %435 = vmatprep.mubr.f32.mxu0 0.0
        %436 = vmatmul.mubr.f32.gmra.mxu0 %v318
        %v437 = vpop.f32.mrf.mxu0
        %v438 = vadd.f32 0.0, %v437
        %v439 = vpop.f32.mrf.mxu0
        %440 = vmatprep.mubr.f32.mxu0 0.0
        %441 = vmatmul.mubr.f32.gmra.mxu0 %v321
        %v442 = vpop.f32.mrf.mxu0
        %v443 = vadd.f32 0.0, %v442
        %v444 = vpop.f32.mrf.mxu0
        %445 = vmatprep.mubr.f32.mxu0 0.0
        %446 = vmatmul.mubr.f32.gmra.mxu0 %v324
        %v447 = vpop.f32.mrf.mxu0
        %v448 = vadd.f32 0.0, %v447
        %v449 = vpop.f32.mrf.mxu0
        %450 = vmatprep.mubr.f32.mxu0 0.0
        %451 = vmatmul.mubr.f32.gmra.mxu0 %v327
        %v452 = vpop.f32.mrf.mxu0
        %v453 = vadd.f32 0.0, %v452
        %v454 = vpop.f32.mrf.mxu0
        %455 = vmatprep.mubr.f32.mxu0 0.0
        %456 = vmatmul.mubr.f32.gmra.mxu0 %v330
        %v457 = vpop.f32.mrf.mxu0
        %v458 = vadd.f32 0.0, %v457
        %v459 = vpop.f32.mrf.mxu0
        %460 = vmatprep.mubr.f32.mxu0 0.0
        %461 = vmatmul.mubr.f32.gmra.mxu0 %v333
        %v462 = vpop.f32.mrf.mxu0
        %v463 = vadd.f32 0.0, %v462
        %v464 = vpop.f32.mrf.mxu0
        %465 = vmatprep.mubr.f32.mxu0 0.0
        %466 = vmatmul.mubr.f32.gmra.mxu0 %v336
        %v467 = vpop.f32.mrf.mxu0
        %v468 = vadd.f32 0.0, %v467
        %v469 = vpop.f32.mrf.mxu0
        %470 = vmatprep.mubr.f32.mxu0 0.0
        %471 = vmatmul.mubr.f32.gmra.mxu0 %v339
        %v472 = vpop.f32.mrf.mxu0
        %v473 = vadd.f32 0.0, %v472
        %v474 = vpop.f32.mrf.mxu0
        %475 = vmatprep.mubr.f32.mxu0 0.0
        %476 = vmatmul.mubr.f32.gmra.mxu0 %v342
        %v477 = vpop.f32.mrf.mxu0
        %v478 = vadd.f32 0.0, %v477
        %v479 = vpop.f32.mrf.mxu0
        %480 = vmatprep.mubr.f32.mxu0 0.0
        %481 = vmatmul.mubr.f32.gmra.mxu0 %v345
        %v482 = vpop.f32.mrf.mxu0
        %v483 = vadd.f32 0.0, %v482
        %v484 = vpop.f32.mrf.mxu0
        %485 = vmatprep.mubr.f32.mxu0 0.0
        %486 = vmatmul.mubr.f32.gmra.mxu0 %v348
        %v487 = vpop.f32.mrf.mxu0
        %v488 = vadd.f32 0.0, %v487
        %v489 = vpop.f32.mrf.mxu0
        %490 = vmatprep.mubr.f32.mxu0 0.0
        %491 = vmatmul.mubr.f32.gmra.mxu0 %v351
        %v492 = vpop.f32.mrf.mxu0
        %v493 = vadd.f32 0.0, %v492
        %v494 = vpop.f32.mrf.mxu0
        %495 = vmatprep.mubr.f32.mxu0 0.0
        %496 = vmatmul.mubr.f32.gmra.mxu0 %v354
        %v497 = vpop.f32.mrf.mxu0
        %v498 = vadd.f32 0.0, %v497
        %v499 = vpop.f32.mrf.mxu0
        %500 = vdwg.mxu0
        loop: start=0, step=1, limit=128
        $region111: #{tpu_custom_call.1} parent=27 // loop_pre_header
          _
        $region112: #{tpu_custom_call.1} parent=27 // loop_header
          %s502 = sphi 0, %s506
          %p503 = scmp.ge.s32.totalorder %s502, 128
        $region113: #{tpu_custom_call.1} parent=27 // loop_header_branch
          %505 = sbr.rel (%p503) target = $region117
        $region114: #{tpu_custom_call.1} parent=27 // loop_body
          %s507 = scalar_lea.sflag [#allocation3], %s164
          %509 = dma.done %s507, 16
        $region115: #{tpu_custom_call.1} parent=27 // loop_footer
          %s506 = sadd.s32 1, %s502
        $region116: #{tpu_custom_call.1} parent=27 // loop_footer_branch
          %501 = sbr.rel target = $region112
        $region117: #{tpu_custom_call.1} parent=27 // loop_exit
          _
        %s510 = smul.u32 %s164, 128
        %s511 = scalar_lea.vmem [#allocation2], %s510
        %v512 = vld [vmem:[%s511] sm:$0xff]
        %v513 = vld [vmem:[%s511 + $0x8] sm:$0xff]
        %v514 = vld [vmem:[%s511 + $0x10] sm:$0xff]
        %v515 = vld [vmem:[%s511 + $0x18] sm:$0xff]
        %v516 = vld [vmem:[%s511 + $0x20] sm:$0xff]
        %v517 = vld [vmem:[%s511 + $0x28] sm:$0xff]
        %v518 = vld [vmem:[%s511 + $0x30] sm:$0xff]
        %v519 = vld [vmem:[%s511 + $0x38] sm:$0xff]
        %v520 = vld [vmem:[%s511 + $0x40] sm:$0xff]
        %v521 = vld [vmem:[%s511 + $0x48] sm:$0xff]
        %v522 = vld [vmem:[%s511 + $0x50] sm:$0xff]
        %v523 = vld [vmem:[%s511 + $0x58] sm:$0xff]
        %v524 = vld [vmem:[%s511 + $0x60] sm:$0xff]
        %v525 = vld [vmem:[%s511 + $0x68] sm:$0xff]
        %v526 = vld [vmem:[%s511 + $0x70] sm:$0xff]
        %v527 = vld [vmem:[%s511 + $0x78] sm:$0xff]
        %v528 = vadd.f32 %v512, %v423
        %v529 = vadd.f32 %v513, %v428
        %v530 = vadd.f32 %v514, %v433
        %v531 = vadd.f32 %v515, %v438
        %v532 = vadd.f32 %v516, %v443
        %v533 = vadd.f32 %v517, %v448
        %v534 = vadd.f32 %v518, %v453
        %v535 = vadd.f32 %v519, %v458
        %v536 = vadd.f32 %v520, %v463
        %v537 = vadd.f32 %v521, %v468
        %v538 = vadd.f32 %v522, %v473
        %v539 = vadd.f32 %v523, %v478
        %v540 = vadd.f32 %v524, %v483
        %v541 = vadd.f32 %v525, %v488
        %v542 = vadd.f32 %v526, %v493
        %v543 = vadd.f32 %v527, %v498
        %544 = vst [vmem:[%s145] sm:$0xff] %v528
        %545 = vst [vmem:[%s145 + $0x8] sm:$0xff] %v529
        %546 = vst [vmem:[%s145 + $0x10] sm:$0xff] %v530
        %547 = vst [vmem:[%s145 + $0x18] sm:$0xff] %v531
        %548 = vst [vmem:[%s145 + $0x20] sm:$0xff] %v532
        %549 = vst [vmem:[%s145 + $0x28] sm:$0xff] %v533
        %550 = vst [vmem:[%s145 + $0x30] sm:$0xff] %v534
        %551 = vst [vmem:[%s145 + $0x38] sm:$0xff] %v535
        %552 = vst [vmem:[%s145 + $0x40] sm:$0xff] %v536
        %553 = vst [vmem:[%s145 + $0x48] sm:$0xff] %v537
        %554 = vst [vmem:[%s145 + $0x50] sm:$0xff] %v538
        %555 = vst [vmem:[%s145 + $0x58] sm:$0xff] %v539
        %556 = vst [vmem:[%s145 + $0x60] sm:$0xff] %v540
        %557 = vst [vmem:[%s145 + $0x68] sm:$0xff] %v541
        %558 = vst [vmem:[%s145 + $0x70] sm:$0xff] %v542
        %559 = vst [vmem:[%s145 + $0x78] sm:$0xff] %v543
        %s560 = sand.u32 %s79, 1
        %s561 = scalar_lea.sflag [#allocation7], %s560
        %s562 = sand.u32 %s79, 1
        %s563 = smul.addr %s562, 128
        %s564 = scalar_lea.vmem [#allocation6], %s563
        // Predicated region
        $region118: #{tpu_custom_call.1} parent=27 // pred_check
          %p565 = pneg %p89
        $region119: #{tpu_custom_call.1} parent=27 // pred_check_branch
          %567 = sbr.rel (%p565) target = $region121
        $region120: #{tpu_custom_call.1} parent=27 // pred_region
          %s568 = smul.u32 16, %s24
          %s570 = ssub.s32 2048, 2048
          %571 = vsyncadd %s561, %s570
          %s572 = smul.addr %s568, 128
          %s573 = scalar_lea.hbm %s4, %s572
          %s574 = sshll.u32 %s564, 4
          %s575 = int_to_ptr.vmem [resolvable:$true] %s574
          %580 = dma.vmem_to_hbm [thread:$0]  %s575, 2048, %s573, %s561, 128, 128, 8
        $region121: #{tpu_custom_call.1} parent=27 // pred_fallthru
          _
      $region28: #{tpu_custom_call.1} parent=5 // pred_fallthru
        _
      %p581 = scmp.le.s32.totalorder 2, %s19
      // Predicated region
      $region122: #{tpu_custom_call.1} parent=5 // pred_check
        %p582 = pneg %p581
      $region123: #{tpu_custom_call.1} parent=5 // pred_check_branch
        %584 = sbr.rel (%p582) target = $region125
      $region124: #{tpu_custom_call.1} parent=5 // pred_region
        %s585 = ssub.s32 %s19, 2
        // Predicated region
        $region126: #{tpu_custom_call.1} parent=124 // pred_check
          %p586 = pneg %p95
        $region127: #{tpu_custom_call.1} parent=124 // pred_check_branch
          %588 = sbr.rel (%p586) target = $region129
        $region128: #{tpu_custom_call.1} parent=124 // pred_region
          %s589 = sand.u32 %s80, 1
          %s590 = scalar_lea.sflag [#allocation7], %s589
          %s591 = sand.u32 %s80, 1
          %s592 = smul.addr %s591, 128
          %s593 = scalar_lea.vmem [#allocation6], %s592
          %594 = dma.done %s590, 2048
        $region129: #{tpu_custom_call.1} parent=124 // pred_fallthru
          _
      $region125: #{tpu_custom_call.1} parent=5 // pred_fallthru
        _
    $region6: #{tpu_custom_call.1} parent=1 // loop_footer
      %s23 = sadd.s32 1, %s19
    $region7: #{tpu_custom_call.1} parent=1 // loop_footer_branch
      %18 = sbr.rel target = $region3
    $region8: #{tpu_custom_call.1} parent=1 // loop_exit
      _
    %595 = vsyncpa [#allocation7], 1
    %s596 = scalar_lea.sflag [#allocation7], 1
    %597 = vsyncpa %s596, 1
  %598 = vsyncmov [#allocation3]
  %s599 = vpop.sfrf %598
  %p600 = scmp.eq.s32.totalorder %s599, 0
  %p601 = pneg %p600
  %603 = shalt.err (%p601)
  %s604 = scalar_lea.sflag [#allocation3], 1
  %605 = vsyncmov %s604
  %s606 = vpop.sfrf %605
  %p607 = scmp.eq.s32.totalorder %s606, 0
  %p608 = pneg %p607
  %610 = shalt.err (%p608)

</llo_original>
